<compile_context>
chip_gen: v5e
topology: v5e:2x2
jax: 0.10.0
libtpu: 0.0.40
codegen_flags: <defaults>
</compile_context>

<pallas_src>
import numpy as np
import jax
import jax.numpy as jnp
from jax.experimental import pallas as pl
from jax.experimental.pallas import tpu as pltpu

BN_EPS = 1e-3  # BatchNorm2d(eps=0.001)


def _round_up(x, m):
    return (x + m - 1) // m * m


def _maybe_pad(a, pads):
    # Skip the HBM copy when no padding is actually needed.
    if all(p == (0, 0) for p in pads):
        return a
    return jnp.pad(a, pads)


# --------------------------------------------------------------------------- #
# Fused kernel: conv-GEMM + BN + ReLU  ||  maxpool + BN + ReLU  -> concat      #
# --------------------------------------------------------------------------- #
def _downsampler_kernel(w_ref, c_ref, p00_ref, p01_ref, p10_ref, p11_ref,
                        sc_ref, tc_ref, sp_ref, tp_ref, o_ref):
    # Conv branch: (Cc, K) @ (K, TN) on the MXU (bf16 inputs, f32 accumulate).
    acc = jnp.dot(w_ref[...], c_ref[0], preferred_element_type=jnp.float32)
    conv = jnp.maximum(acc * sc_ref[...] + tc_ref[...], 0.0)

    # MaxPool branch: elementwise max of the four 2x2 phases, then BN + ReLU.
    pool = jnp.maximum(jnp.maximum(p00_ref[0], p01_ref[0]),
                       jnp.maximum(p10_ref[0], p11_ref[0]))
    pool = jnp.maximum(pool * sp_ref[...] + tp_ref[...], 0.0)

    # Channel concat happens directly in the output tile (two lane-dense
    # stores covering the whole block).
    cc = conv.shape[0]
    o_ref[0, :cc, :] = conv
    o_ref[0, cc:, :] = pool


def downsampler_block(x, params):
    """x: (N, Cin, H, W) f32 -> (N, Cout, H//2, W//2) f32 (Cout = Cc + Cin)."""
    w, b = params["conv_w"], params["conv_b"]          # (Cc, Cin, 3, 3), (Cc,)
    gamma, beta = params["bn_gamma"], params["bn_beta"]
    mean, var = params["bn_mean"], params["bn_var"]

    N, Cin, H, W = x.shape
    Cc = w.shape[0]
    Cout = Cc + Cin
    assert H % 2 == 0 and W % 2 == 0, "DownsamplerBlock needs even H, W"
    Ho, Wo = H // 2, W // 2
    M = Ho * Wo
    K = Cin * 9
    Kp = _round_up(K, 16)                    # bf16 sublane packing; never 128

    TN = 512 if M >= 512 else _round_up(M, 128)   # lane (spatial) tile
    Mp = _round_up(M, TN)

    # ---- fold conv bias + eval-mode BatchNorm into per-channel scale/shift --
    s_all = gamma / jnp.sqrt(var + BN_EPS)
    t_all = beta - mean * s_all
    s_c = s_all[:Cc].reshape(Cc, 1).astype(jnp.float32)
    t_c = (b * s_all[:Cc] + t_all[:Cc]).reshape(Cc, 1).astype(jnp.float32)
    s_p = s_all[Cc:].reshape(Cin, 1).astype(jnp.float32)
    t_p = t_all[Cc:].reshape(Cin, 1).astype(jnp.float32)

    # ---- conv operands: weight (Cc, Kp) bf16, im2col columns (N, Kp, Mp) bf16
    w2d = _maybe_pad(w.reshape(Cc, K), ((0, 0), (0, Kp - K))).astype(jnp.bfloat16)

    xp = jnp.pad(x, ((0, 0), (0, 0), (1, 1), (1, 1)))
    taps = []
    for i in range(3):
        for j in range(3):
            taps.append(xp[:, :, i:i + 2 * (Ho - 1) + 1:2,
                               j:j + 2 * (Wo - 1) + 1:2])
    # (N, Cin, 9, Ho, Wo) -> (N, Cin*9, Ho*Wo); K order (cin, kh, kw) matches
    # w.reshape(Cc, Cin*9).  No transposes: this is already the GEMM RHS layout.
    cols = jnp.stack(taps, axis=2).reshape(N, K, M)
    cols = _maybe_pad(cols, ((0, 0), (0, Kp - K), (0, Mp - M))).astype(jnp.bfloat16)
    # TODO(synk): the tap expansion (2.25x bytes at stride 2) could be folded
    # into the kernel with per-tap index offsets / manual DMA instead of JAX glue.

    # ---- pool operands: the four 2x2 phases, flattened to (N, Cin, Mp) f32 --
    phases = []
    for i in range(2):
        for j in range(2):
            ph = x[:, :, i:Ho * 2:2, j:Wo * 2:2].reshape(N, Cin, M)
            phases.append(_maybe_pad(ph, ((0, 0), (0, 0), (0, Mp - M))))

    def vec_spec(c):
        return pl.BlockSpec((1, c, TN), lambda bi, mi: (bi, 0, mi))

    def const_spec(r, c):
        return pl.BlockSpec((r, c), lambda bi, mi: (0, 0))

    out = pl.pallas_call(
        _downsampler_kernel,
        out_shape=jax.ShapeDtypeStruct((N, Cout, Mp), jnp.float32),
        grid=(N, Mp // TN),
        in_specs=[
            const_spec(Cc, Kp),                                    # weight (resident)
            vec_spec(Kp),                                          # im2col columns
            vec_spec(Cin), vec_spec(Cin), vec_spec(Cin), vec_spec(Cin),  # pool phases
            const_spec(Cc, 1), const_spec(Cc, 1),                  # conv scale/shift
            const_spec(Cin, 1), const_spec(Cin, 1),                # pool scale/shift
        ],
        out_specs=pl.BlockSpec((1, Cout, TN), lambda bi, mi: (bi, 0, mi)),
        compiler_params=pltpu.CompilerParams(
            dimension_semantics=("parallel", "parallel")),
    )(w2d, cols, *phases, s_c, t_c, s_p, t_p)

    return out[:, :, :M].reshape(N, Cout, Ho, Wo)


# --------------------------------------------------------------------------- #
# Pure-JAX f32 reference (PyTorch eval-mode semantics)                         #
# --------------------------------------------------------------------------- #
def _reference(x, params):
    conv = jax.lax.conv_general_dilated(
        x, params["conv_w"], window_strides=(2, 2), padding=((1, 1), (1, 1)),
        dimension_numbers=("NCHW", "OIHW", "NCHW"))
    conv = conv + params["conv_b"][None, :, None, None]
    N, Cin, H, W = x.shape
    pool = x[:, :, :H // 2 * 2, :W // 2 * 2].reshape(
        N, Cin, H // 2, 2, W // 2, 2).max(axis=(3, 5))
    cat = jnp.concatenate([conv, pool], axis=1)
    s = params["bn_gamma"] / jnp.sqrt(params["bn_var"] + BN_EPS)
    t = params["bn_beta"] - params["bn_mean"] * s
    return jnp.maximum(cat * s[None, :, None, None] + t[None, :, None, None], 0.0)


# --------------------------------------------------------------------------- #
if __name__ == "__main__":
    key = jax.random.PRNGKey(0)
    k1, k2, k3, k4, k5, k6, k7 = jax.random.split(key, 7)

    # Small shapes consistent with the module (ERFNet's 16 -> 64 downsampler).
    N, Cin, H, W = 2, 16, 32, 32
    Cout = 64
    Cc = Cout - Cin

    x = jax.random.normal(k1, (N, Cin, H, W), jnp.float32)
    params = {
        "conv_w": jax.random.normal(k2, (Cc, Cin, 3, 3), jnp.float32)
                  * np.sqrt(2.0 / (Cin * 9)),
        "conv_b": 0.05 * jax.random.normal(k3, (Cc,), jnp.float32),
        "bn_gamma": 1.0 + 0.1 * jax.random.normal(k4, (Cout,), jnp.float32),
        "bn_beta": 0.05 * jax.random.normal(k5, (Cout,), jnp.float32),
        "bn_mean": 0.05 * jax.random.normal(k6, (Cout,), jnp.float32),
        "bn_var": jnp.abs(1.0 + 0.1 * jax.random.normal(k7, (Cout,), jnp.float32)),
    }

    fwd = jax.jit(lambda inp: downsampler_block(inp, params))
    out = fwd(x)
    jax.block_until_ready(out)

    ref = _reference(x, params)
    err = float(jnp.max(jnp.abs(out - ref)))
    scale = float(jnp.max(jnp.abs(ref))) + 1e-6

    assert out.shape == (N, Cout, H // 2, W // 2), out.shape
    assert bool(jnp.all(jnp.isfinite(out)))
    # bf16 MXU inputs with f32 accumulation: allow ~5% of the output scale.
    assert err <= 5e-2 * scale + 1e-2, (err, scale)
    print("KERNEL_OK")
</pallas_src>

<mosaic_0001>
module attributes {stable_mosaic.version = 11 : i64} {
  func.func @_downsampler_kernel(%arg0: i32, %arg1: i32, %arg2: memref<48x144xbf16, #tpu.memory_space<vmem>>, %arg3: memref<1x144x256xbf16, #tpu.memory_space<vmem>>, %arg4: memref<1x16x256xf32, #tpu.memory_space<vmem>>, %arg5: memref<1x16x256xf32, #tpu.memory_space<vmem>>, %arg6: memref<1x16x256xf32, #tpu.memory_space<vmem>>, %arg7: memref<1x16x256xf32, #tpu.memory_space<vmem>>, %arg8: memref<48x1xf32, #tpu.memory_space<vmem>>, %arg9: memref<48x1xf32, #tpu.memory_space<vmem>>, %arg10: memref<16x1xf32, #tpu.memory_space<vmem>>, %arg11: memref<16x1xf32, #tpu.memory_space<vmem>>, %arg12: memref<1x64x256xf32, #tpu.memory_space<vmem>>) attributes {dimension_semantics = [#tpu.dimension_semantics<parallel>, #tpu.dimension_semantics<parallel>], iteration_bounds = array<i64: 2, 1>, scalar_prefetch = 0 : i64, scratch_operands = 0 : i64, tpu.core_type = #tpu.core_type<tc>, window_params = [{pipeline_mode = #tpu.pipeline_mode<synchronous>, transform_indices = @transform_0, window_bounds = array<i64: 48, 144>}, {transform_indices = @transform_1, window_bounds = array<i64: 1, 144, 256>}, {transform_indices = @transform_2, window_bounds = array<i64: 1, 16, 256>}, {transform_indices = @transform_3, window_bounds = array<i64: 1, 16, 256>}, {transform_indices = @transform_4, window_bounds = array<i64: 1, 16, 256>}, {transform_indices = @transform_5, window_bounds = array<i64: 1, 16, 256>}, {pipeline_mode = #tpu.pipeline_mode<synchronous>, transform_indices = @transform_6, window_bounds = array<i64: 48, 1>}, {pipeline_mode = #tpu.pipeline_mode<synchronous>, transform_indices = @transform_7, window_bounds = array<i64: 48, 1>}, {pipeline_mode = #tpu.pipeline_mode<synchronous>, transform_indices = @transform_8, window_bounds = array<i64: 16, 1>}, {pipeline_mode = #tpu.pipeline_mode<synchronous>, transform_indices = @transform_9, window_bounds = array<i64: 16, 1>}, {transform_indices = @transform_10, window_bounds = array<i64: 1, 64, 256>}]} {
    %c0 = arith.constant 0 : index
    %c0_0 = arith.constant 0 : index
    %0 = vector.load %arg2[%c0, %c0_0] : memref<48x144xbf16, #tpu.memory_space<vmem>>, vector<48x144xbf16>
    %c0_1 = arith.constant 0 : index
    %c0_2 = arith.constant 0 : index
    %c0_3 = arith.constant 0 : index
    %1 = vector.load %arg3[%c0_1, %c0_2, %c0_3] : memref<1x144x256xbf16, #tpu.memory_space<vmem>>, vector<1x144x256xbf16>
    %2 = vector.shape_cast %1 : vector<1x144x256xbf16> to vector<144x256xbf16>
    %cst = arith.constant dense<0.000000e+00> : vector<48x256xf32>
    %3 = tpu.matmul %0, %2, %cst {dimension_numbers = #tpu.dot_dimension_numbers<[1], [0], [0], [1], [0, 0, 1, 1], [], []>} : vector<48x144xbf16>, vector<144x256xbf16>, vector<48x256xf32> -> vector<48x256xf32>
    %c0_4 = arith.constant 0 : index
    %c0_5 = arith.constant 0 : index
    %4 = vector.load %arg8[%c0_4, %c0_5] : memref<48x1xf32, #tpu.memory_space<vmem>>, vector<48x1xf32>
    %5 = vector.broadcast %4 : vector<48x1xf32> to vector<48x256xf32>
    %6 = arith.mulf %3, %5 : vector<48x256xf32>
    %c0_6 = arith.constant 0 : index
    %c0_7 = arith.constant 0 : index
    %7 = vector.load %arg9[%c0_6, %c0_7] : memref<48x1xf32, #tpu.memory_space<vmem>>, vector<48x1xf32>
    %8 = vector.broadcast %7 : vector<48x1xf32> to vector<48x256xf32>
    %9 = arith.addf %6, %8 : vector<48x256xf32>
    %cst_8 = arith.constant 0.000000e+00 : f32
    %10 = vector.broadcast %cst_8 : f32 to vector<48x256xf32>
    %11 = arith.maximumf %9, %10 : vector<48x256xf32>
    %c0_9 = arith.constant 0 : index
    %c0_10 = arith.constant 0 : index
    %c0_11 = arith.constant 0 : index
    %12 = vector.load %arg4[%c0_9, %c0_10, %c0_11] : memref<1x16x256xf32, #tpu.memory_space<vmem>>, vector<1x16x256xf32>
    %13 = vector.shape_cast %12 : vector<1x16x256xf32> to vector<16x256xf32>
    %c0_12 = arith.constant 0 : index
    %c0_13 = arith.constant 0 : index
    %c0_14 = arith.constant 0 : index
    %14 = vector.load %arg5[%c0_12, %c0_13, %c0_14] : memref<1x16x256xf32, #tpu.memory_space<vmem>>, vector<1x16x256xf32>
    %15 = vector.shape_cast %14 : vector<1x16x256xf32> to vector<16x256xf32>
    %16 = arith.maximumf %13, %15 : vector<16x256xf32>
    %c0_15 = arith.constant 0 : index
    %c0_16 = arith.constant 0 : index
    %c0_17 = arith.constant 0 : index
    %17 = vector.load %arg6[%c0_15, %c0_16, %c0_17] : memref<1x16x256xf32, #tpu.memory_space<vmem>>, vector<1x16x256xf32>
    %18 = vector.shape_cast %17 : vector<1x16x256xf32> to vector<16x256xf32>
    %c0_18 = arith.constant 0 : index
    %c0_19 = arith.constant 0 : index
    %c0_20 = arith.constant 0 : index
    %19 = vector.load %arg7[%c0_18, %c0_19, %c0_20] : memref<1x16x256xf32, #tpu.memory_space<vmem>>, vector<1x16x256xf32>
    %20 = vector.shape_cast %19 : vector<1x16x256xf32> to vector<16x256xf32>
    %21 = arith.maximumf %18, %20 : vector<16x256xf32>
    %22 = arith.maximumf %16, %21 : vector<16x256xf32>
    %c0_21 = arith.constant 0 : index
    %c0_22 = arith.constant 0 : index
    %23 = vector.load %arg10[%c0_21, %c0_22] : memref<16x1xf32, #tpu.memory_space<vmem>>, vector<16x1xf32>
    %24 = vector.broadcast %23 : vector<16x1xf32> to vector<16x256xf32>
    %25 = arith.mulf %22, %24 : vector<16x256xf32>
    %c0_23 = arith.constant 0 : index
    %c0_24 = arith.constant 0 : index
    %26 = vector.load %arg11[%c0_23, %c0_24] : memref<16x1xf32, #tpu.memory_space<vmem>>, vector<16x1xf32>
    %27 = vector.broadcast %26 : vector<16x1xf32> to vector<16x256xf32>
    %28 = arith.addf %25, %27 : vector<16x256xf32>
    %cst_25 = arith.constant 0.000000e+00 : f32
    %29 = vector.broadcast %cst_25 : f32 to vector<16x256xf32>
    %30 = arith.maximumf %28, %29 : vector<16x256xf32>
    %c0_26 = arith.constant 0 : index
    %c0_27 = arith.constant 0 : index
    %c0_28 = arith.constant 0 : index
    %31 = vector.load %arg12[%c0_26, %c0_27, %c0_28] : memref<1x64x256xf32, #tpu.memory_space<vmem>>, vector<1x48x256xf32>
    %32 = vector.shape_cast %31 : vector<1x48x256xf32> to vector<48x256xf32>
    %33 = vector.shape_cast %11 : vector<48x256xf32> to vector<1x48x256xf32>
    tpu.vector_store %arg12[%c0_26, %c0_27, %c0_28], %33 {strides = array<i32>} : memref<1x64x256xf32, #tpu.memory_space<vmem>>, vector<1x48x256xf32>,
    %c0_29 = arith.constant 0 : index
    %c48 = arith.constant 48 : index
    %c0_30 = arith.constant 0 : index
    %34 = vector.load %arg12[%c0_29, %c48, %c0_30] : memref<1x64x256xf32, #tpu.memory_space<vmem>>, vector<1x16x256xf32>
    %35 = vector.shape_cast %34 : vector<1x16x256xf32> to vector<16x256xf32>
    %36 = vector.shape_cast %30 : vector<16x256xf32> to vector<1x16x256xf32>
    tpu.vector_store %arg12[%c0_29, %c48, %c0_30], %36 {strides = array<i32>} : memref<1x64x256xf32, #tpu.memory_space<vmem>>, vector<1x16x256xf32>,
    return
  }
  func.func @transform_0(%arg0: i32, %arg1: i32) -> (i32, i32) {
    %c0_i32 = arith.constant 0 : i32
    %c0_i32_0 = arith.constant 0 : i32
    %c0_i32_1 = arith.constant 0 : i32
    return %c0_i32, %c0_i32_0 : i32, i32
  }
  func.func @transform_1(%arg0: i32, %arg1: i32) -> (i32, i32, i32) {
    %c0_i32 = arith.constant 0 : i32
    %c0_i32_0 = arith.constant 0 : i32
    return %arg0, %c0_i32, %arg1 : i32, i32, i32
  }
  func.func @transform_2(%arg0: i32, %arg1: i32) -> (i32, i32, i32) {
    %c0_i32 = arith.constant 0 : i32
    %c0_i32_0 = arith.constant 0 : i32
    return %arg0, %c0_i32, %arg1 : i32, i32, i32
  }
  func.func @transform_3(%arg0: i32, %arg1: i32) -> (i32, i32, i32) {
    %c0_i32 = arith.constant 0 : i32
    %c0_i32_0 = arith.constant 0 : i32
    return %arg0, %c0_i32, %arg1 : i32, i32, i32
  }
  func.func @transform_4(%arg0: i32, %arg1: i32) -> (i32, i32, i32) {
    %c0_i32 = arith.constant 0 : i32
    %c0_i32_0 = arith.constant 0 : i32
    return %arg0, %c0_i32, %arg1 : i32, i32, i32
  }
  func.func @transform_5(%arg0: i32, %arg1: i32) -> (i32, i32, i32) {
    %c0_i32 = arith.constant 0 : i32
    %c0_i32_0 = arith.constant 0 : i32
    return %arg0, %c0_i32, %arg1 : i32, i32, i32
  }
  func.func @transform_6(%arg0: i32, %arg1: i32) -> (i32, i32) {
    %c0_i32 = arith.constant 0 : i32
    %c0_i32_0 = arith.constant 0 : i32
    %c0_i32_1 = arith.constant 0 : i32
    return %c0_i32, %c0_i32_0 : i32, i32
  }
  func.func @transform_7(%arg0: i32, %arg1: i32) -> (i32, i32) {
    %c0_i32 = arith.constant 0 : i32
    %c0_i32_0 = arith.constant 0 : i32
    %c0_i32_1 = arith.constant 0 : i32
    return %c0_i32, %c0_i32_0 : i32, i32
  }
  func.func @transform_8(%arg0: i32, %arg1: i32) -> (i32, i32) {
    %c0_i32 = arith.constant 0 : i32
    %c0_i32_0 = arith.constant 0 : i32
    %c0_i32_1 = arith.constant 0 : i32
    return %c0_i32, %c0_i32_0 : i32, i32
  }
  func.func @transform_9(%arg0: i32, %arg1: i32) -> (i32, i32) {
    %c0_i32 = arith.constant 0 : i32
    %c0_i32_0 = arith.constant 0 : i32
    %c0_i32_1 = arith.constant 0 : i32
    return %c0_i32, %c0_i32_0 : i32, i32
  }
  func.func @transform_10(%arg0: i32, %arg1: i32) -> (i32, i32, i32) {
    %c0_i32 = arith.constant 0 : i32
    %c0_i32_0 = arith.constant 0 : i32
    return %arg0, %c0_i32, %arg1 : i32, i32, i32
  }
}

</mosaic_0001>

<llo_original>
// kernel: _lambda_.1
$region0: #{_lambda_.1}
  #allocation0 [shape = 'u32[]', space=smem, size = 0x4, offset = 0x4, fixed_abs, tag = 'smem constant byte address 0x4 - core index']
  #allocation1 [shape = 'u32[72,128]{1,0:T(1,128)}', space=vmem, size = 0x9000, scoped, tag = 'internal scratch']
  %s0 = inlined_call_operand.vmem [shape: bf16[48,144], index: 0, kind: input, shape index: {}]
  %s1 = inlined_call_operand.vmem [shape: bf16[2,144,256], index: 1, kind: input, shape index: {}]
  %s2 = inlined_call_operand.vmem [shape: f32[2,16,256], index: 2, kind: input, shape index: {}]
  %s3 = inlined_call_operand.vmem [shape: f32[2,16,256], index: 3, kind: input, shape index: {}]
  %s4 = inlined_call_operand.vmem [shape: f32[2,16,256], index: 4, kind: input, shape index: {}]
  %s5 = inlined_call_operand.vmem [shape: f32[2,16,256], index: 5, kind: input, shape index: {}]
  %s6 = inlined_call_operand.vmem [shape: f32[48,1], index: 6, kind: input, shape index: {}]
  %s7 = inlined_call_operand.vmem [shape: f32[48,1], index: 7, kind: input, shape index: {}]
  %s8 = inlined_call_operand.vmem [shape: f32[16,1], index: 8, kind: input, shape index: {}]
  %s9 = inlined_call_operand.vmem [shape: f32[16,1], index: 9, kind: input, shape index: {}]
  %s10 = inlined_call_operand.vmem [shape: f32[2,64,256], index: 10, kind: output, shape index: {}]
  %s11 = sld [smem:[#allocation0]]
  $region73: #{_lambda_.1} parent=0
    _
  %s13 = ssub.s32 1, %s11
  %s14 = scalar_select 0, %s13, %s11
  loop: start=0, step=1, limit=4
  $region2: #{_lambda_.1} parent=0 // loop_pre_header
    _
  $region3: #{_lambda_.1} parent=0 // loop_header
    %s16 = sphi 0, %s20
    %p17 = scmp.ge.s32.totalorder %s16, 4
    %s23 = sphi 0, %s35
    %s24 = sphi 0, %s31
    %s25 = sphi 0, %s23
    %s26 = sphi 0, %s24
    %s27 = sphi 0, %s25
    %s28 = sphi 0, %s26
    %s36 = sphi 0, %s36
    %s38 = sphi 0, %s36
    %s39 = sphi 0, %s38
    %s53 = sphi 0, %s39
    %s61 = sphi 0, %s63
    %s64 = sphi 0, %s61
    %s65 = sphi 0, %s64
    %s81 = sphi 0, %s65
    %s89 = sphi 0, %s91
    %s92 = sphi 0, %s89
    %s93 = sphi 0, %s92
    %s109 = sphi 0, %s93
    %s117 = sphi 0, %s119
    %s120 = sphi 0, %s117
    %s121 = sphi 0, %s120
    %s137 = sphi 0, %s121
    %s145 = sphi 0, %s147
    %s148 = sphi 0, %s145
    %s149 = sphi 0, %s148
    %s165 = sphi 0, %s149
    %s173 = sphi 0, %s175
    %s176 = sphi 0, %s173
    %s177 = sphi 0, %s176
    %s193 = sphi 0, %s177
    %s197 = sphi 0, %s197
    %s199 = sphi 0, %s197
    %s200 = sphi 0, %s199
    %s214 = sphi 0, %s200
    %s218 = sphi 0, %s218
    %s220 = sphi 0, %s218
    %s221 = sphi 0, %s220
    %s235 = sphi 0, %s221
    %s239 = sphi 0, %s239
    %s241 = sphi 0, %s239
    %s242 = sphi 0, %s241
    %s256 = sphi 0, %s242
    %s260 = sphi 0, %s260
    %s262 = sphi 0, %s260
    %s263 = sphi 0, %s262
    %s277 = sphi 0, %s263
    %s285 = sphi 0, %s287
    %s288 = sphi 0, %s285
    %s289 = sphi 0, %s288
    %s305 = sphi 0, %s289
  $region4: #{_lambda_.1} parent=0 // loop_header_branch
    %19 = sbr.rel (%p17) target = $region8
  $region5: #{_lambda_.1} parent=0 // loop_body
    %s21 = ssub.s32 %s16, 1
    %s22 = ssub.s32 %s16, 2
    %s29 = sadd.s32 1, %s24
    %p30 = scmp.ge.s32.totalorder %s29, 1
    %s31 = scalar_select %p30, 0, %s29
    %s32 = sadd.s32 1, %s23
    %s33 = scalar_select %p30, %s32, %s23
    %p34 = scmp.ge.s32.totalorder %s33, 2
    %s35 = scalar_select %p34, 0, %s33
    %s37 = sadd.s32 %s36, 1
    %p40 = scmp.eq.s32.totalorder %s16, 1
    %p41 = scmp.ne.s32.totalorder %s36, %s38
    %p42 = scmp.eq.s32.totalorder %s16, 0
    %p43 = por %p41, %p42
    %p44 = scmp.ne.s32.totalorder %s36, %s38
    %p45 = scmp.eq.s32.totalorder %s21, 1
    %p46 = por %p44, %p45
    %p47 = scmp.ne.s32.totalorder %s38, %s39
    %p48 = scmp.eq.s32.totalorder %s21, 0
    %p49 = por %p47, %p48
    %p50 = scmp.ne.s32.totalorder %s38, %s39
    %p51 = scmp.eq.s32.totalorder %s22, 1
    %p52 = por %p50, %p51
    %p54 = scmp.ne.s32.totalorder %s39, %s53
    %p55 = scmp.eq.s32.totalorder %s22, 0
    %p56 = por %p54, %p55
    %s57 = ssub.s32 %s23, %s35
    %s58 = ssub.s32 %s24, %s31
    %s59 = sor.u32 %s57, %s58
    %p60 = scmp.eq.s32.totalorder %s59, 0
    %s62 = sadd.s32 %s61, 1
    %s63 = scalar_select %p60, %s61, %s62
    %p66 = pneg %p60
    %p67 = scmp.eq.s32.totalorder %s16, 1
    %p68 = por %p66, %p67
    %p69 = scmp.ne.s32.totalorder %s61, %s64
    %p70 = scmp.eq.s32.totalorder %s16, 0
    %p71 = por %p69, %p70
    %p72 = scmp.ne.s32.totalorder %s61, %s64
    %p73 = scmp.eq.s32.totalorder %s21, 1
    %p74 = por %p72, %p73
    %p75 = scmp.ne.s32.totalorder %s64, %s65
    %p76 = scmp.eq.s32.totalorder %s21, 0
    %p77 = por %p75, %p76
    %p78 = scmp.ne.s32.totalorder %s64, %s65
    %p79 = scmp.eq.s32.totalorder %s22, 1
    %p80 = por %p78, %p79
    %p82 = scmp.ne.s32.totalorder %s65, %s81
    %p83 = scmp.eq.s32.totalorder %s22, 0
    %p84 = por %p82, %p83
    %s85 = ssub.s32 %s23, %s35
    %s86 = ssub.s32 %s24, %s31
    %s87 = sor.u32 %s85, %s86
    %p88 = scmp.eq.s32.totalorder %s87, 0
    %s90 = sadd.s32 %s89, 1
    %s91 = scalar_select %p88, %s89, %s90
    %p94 = pneg %p88
    %p95 = scmp.eq.s32.totalorder %s16, 1
    %p96 = por %p94, %p95
    %p97 = scmp.ne.s32.totalorder %s89, %s92
    %p98 = scmp.eq.s32.totalorder %s16, 0
    %p99 = por %p97, %p98
    %p100 = scmp.ne.s32.totalorder %s89, %s92
    %p101 = scmp.eq.s32.totalorder %s21, 1
    %p102 = por %p100, %p101
    %p103 = scmp.ne.s32.totalorder %s92, %s93
    %p104 = scmp.eq.s32.totalorder %s21, 0
    %p105 = por %p103, %p104
    %p106 = scmp.ne.s32.totalorder %s92, %s93
    %p107 = scmp.eq.s32.totalorder %s22, 1
    %p108 = por %p106, %p107
    %p110 = scmp.ne.s32.totalorder %s93, %s109
    %p111 = scmp.eq.s32.totalorder %s22, 0
    %p112 = por %p110, %p111
    %s113 = ssub.s32 %s23, %s35
    %s114 = ssub.s32 %s24, %s31
    %s115 = sor.u32 %s113, %s114
    %p116 = scmp.eq.s32.totalorder %s115, 0
    %s118 = sadd.s32 %s117, 1
    %s119 = scalar_select %p116, %s117, %s118
    %p122 = pneg %p116
    %p123 = scmp.eq.s32.totalorder %s16, 1
    %p124 = por %p122, %p123
    %p125 = scmp.ne.s32.totalorder %s117, %s120
    %p126 = scmp.eq.s32.totalorder %s16, 0
    %p127 = por %p125, %p126
    %p128 = scmp.ne.s32.totalorder %s117, %s120
    %p129 = scmp.eq.s32.totalorder %s21, 1
    %p130 = por %p128, %p129
    %p131 = scmp.ne.s32.totalorder %s120, %s121
    %p132 = scmp.eq.s32.totalorder %s21, 0
    %p133 = por %p131, %p132
    %p134 = scmp.ne.s32.totalorder %s120, %s121
    %p135 = scmp.eq.s32.totalorder %s22, 1
    %p136 = por %p134, %p135
    %p138 = scmp.ne.s32.totalorder %s121, %s137
    %p139 = scmp.eq.s32.totalorder %s22, 0
    %p140 = por %p138, %p139
    %s141 = ssub.s32 %s23, %s35
    %s142 = ssub.s32 %s24, %s31
    %s143 = sor.u32 %s141, %s142
    %p144 = scmp.eq.s32.totalorder %s143, 0
    %s146 = sadd.s32 %s145, 1
    %s147 = scalar_select %p144, %s145, %s146
    %p150 = pneg %p144
    %p151 = scmp.eq.s32.totalorder %s16, 1
    %p152 = por %p150, %p151
    %p153 = scmp.ne.s32.totalorder %s145, %s148
    %p154 = scmp.eq.s32.totalorder %s16, 0
    %p155 = por %p153, %p154
    %p156 = scmp.ne.s32.totalorder %s145, %s148
    %p157 = scmp.eq.s32.totalorder %s21, 1
    %p158 = por %p156, %p157
    %p159 = scmp.ne.s32.totalorder %s148, %s149
    %p160 = scmp.eq.s32.totalorder %s21, 0
    %p161 = por %p159, %p160
    %p162 = scmp.ne.s32.totalorder %s148, %s149
    %p163 = scmp.eq.s32.totalorder %s22, 1
    %p164 = por %p162, %p163
    %p166 = scmp.ne.s32.totalorder %s149, %s165
    %p167 = scmp.eq.s32.totalorder %s22, 0
    %p168 = por %p166, %p167
    %s169 = ssub.s32 %s23, %s35
    %s170 = ssub.s32 %s24, %s31
    %s171 = sor.u32 %s169, %s170
    %p172 = scmp.eq.s32.totalorder %s171, 0
    %s174 = sadd.s32 %s173, 1
    %s175 = scalar_select %p172, %s173, %s174
    %p178 = pneg %p172
    %p179 = scmp.eq.s32.totalorder %s16, 1
    %p180 = por %p178, %p179
    %p181 = scmp.ne.s32.totalorder %s173, %s176
    %p182 = scmp.eq.s32.totalorder %s16, 0
    %p183 = por %p181, %p182
    %p184 = scmp.ne.s32.totalorder %s173, %s176
    %p185 = scmp.eq.s32.totalorder %s21, 1
    %p186 = por %p184, %p185
    %p187 = scmp.ne.s32.totalorder %s176, %s177
    %p188 = scmp.eq.s32.totalorder %s21, 0
    %p189 = por %p187, %p188
    %p190 = scmp.ne.s32.totalorder %s176, %s177
    %p191 = scmp.eq.s32.totalorder %s22, 1
    %p192 = por %p190, %p191
    %p194 = scmp.ne.s32.totalorder %s177, %s193
    %p195 = scmp.eq.s32.totalorder %s22, 0
    %p196 = por %p194, %p195
    %s198 = sadd.s32 %s197, 1
    %p201 = scmp.eq.s32.totalorder %s16, 1
    %p202 = scmp.ne.s32.totalorder %s197, %s199
    %p203 = scmp.eq.s32.totalorder %s16, 0
    %p204 = por %p202, %p203
    %p205 = scmp.ne.s32.totalorder %s197, %s199
    %p206 = scmp.eq.s32.totalorder %s21, 1
    %p207 = por %p205, %p206
    %p208 = scmp.ne.s32.totalorder %s199, %s200
    %p209 = scmp.eq.s32.totalorder %s21, 0
    %p210 = por %p208, %p209
    %p211 = scmp.ne.s32.totalorder %s199, %s200
    %p212 = scmp.eq.s32.totalorder %s22, 1
    %p213 = por %p211, %p212
    %p215 = scmp.ne.s32.totalorder %s200, %s214
    %p216 = scmp.eq.s32.totalorder %s22, 0
    %p217 = por %p215, %p216
    %s219 = sadd.s32 %s218, 1
    %p222 = scmp.eq.s32.totalorder %s16, 1
    %p223 = scmp.ne.s32.totalorder %s218, %s220
    %p224 = scmp.eq.s32.totalorder %s16, 0
    %p225 = por %p223, %p224
    %p226 = scmp.ne.s32.totalorder %s218, %s220
    %p227 = scmp.eq.s32.totalorder %s21, 1
    %p228 = por %p226, %p227
    %p229 = scmp.ne.s32.totalorder %s220, %s221
    %p230 = scmp.eq.s32.totalorder %s21, 0
    %p231 = por %p229, %p230
    %p232 = scmp.ne.s32.totalorder %s220, %s221
    %p233 = scmp.eq.s32.totalorder %s22, 1
    %p234 = por %p232, %p233
    %p236 = scmp.ne.s32.totalorder %s221, %s235
    %p237 = scmp.eq.s32.totalorder %s22, 0
    %p238 = por %p236, %p237
    %s240 = sadd.s32 %s239, 1
    %p243 = scmp.eq.s32.totalorder %s16, 1
    %p244 = scmp.ne.s32.totalorder %s239, %s241
    %p245 = scmp.eq.s32.totalorder %s16, 0
    %p246 = por %p244, %p245
    %p247 = scmp.ne.s32.totalorder %s239, %s241
    %p248 = scmp.eq.s32.totalorder %s21, 1
    %p249 = por %p247, %p248
    %p250 = scmp.ne.s32.totalorder %s241, %s242
    %p251 = scmp.eq.s32.totalorder %s21, 0
    %p252 = por %p250, %p251
    %p253 = scmp.ne.s32.totalorder %s241, %s242
    %p254 = scmp.eq.s32.totalorder %s22, 1
    %p255 = por %p253, %p254
    %p257 = scmp.ne.s32.totalorder %s242, %s256
    %p258 = scmp.eq.s32.totalorder %s22, 0
    %p259 = por %p257, %p258
    %s261 = sadd.s32 %s260, 1
    %p264 = scmp.eq.s32.totalorder %s16, 1
    %p265 = scmp.ne.s32.totalorder %s260, %s262
    %p266 = scmp.eq.s32.totalorder %s16, 0
    %p267 = por %p265, %p266
    %p268 = scmp.ne.s32.totalorder %s260, %s262
    %p269 = scmp.eq.s32.totalorder %s21, 1
    %p270 = por %p268, %p269
    %p271 = scmp.ne.s32.totalorder %s262, %s263
    %p272 = scmp.eq.s32.totalorder %s21, 0
    %p273 = por %p271, %p272
    %p274 = scmp.ne.s32.totalorder %s262, %s263
    %p275 = scmp.eq.s32.totalorder %s22, 1
    %p276 = por %p274, %p275
    %p278 = scmp.ne.s32.totalorder %s263, %s277
    %p279 = scmp.eq.s32.totalorder %s22, 0
    %p280 = por %p278, %p279
    %s281 = ssub.s32 %s23, %s35
    %s282 = ssub.s32 %s24, %s31
    %s283 = sor.u32 %s281, %s282
    %p284 = scmp.eq.s32.totalorder %s283, 0
    %s286 = sadd.s32 %s285, 1
    %s287 = scalar_select %p284, %s285, %s286
    %p290 = pneg %p284
    %p291 = scmp.eq.s32.totalorder %s16, 1
    %p292 = por %p290, %p291
    %p293 = scmp.ne.s32.totalorder %s285, %s288
    %p294 = scmp.eq.s32.totalorder %s16, 0
    %p295 = por %p293, %p294
    %p296 = scmp.ne.s32.totalorder %s285, %s288
    %p297 = scmp.eq.s32.totalorder %s21, 1
    %p298 = por %p296, %p297
    %p299 = scmp.ne.s32.totalorder %s288, %s289
    %p300 = scmp.eq.s32.totalorder %s21, 0
    %p301 = por %p299, %p300
    %p302 = scmp.ne.s32.totalorder %s288, %s289
    %p303 = scmp.eq.s32.totalorder %s22, 1
    %p304 = por %p302, %p303
    %p306 = scmp.ne.s32.totalorder %s289, %s305
    %p307 = scmp.eq.s32.totalorder %s22, 0
    %p308 = por %p306, %p307
    %p309 = scmp.le.s32.totalorder 1, %s16
    %p310 = scmp.lt.s32.totalorder %s16, 3
    %p311 = pnand %p309, %p310
    %p312 = pneg %p311
    // Predicated region
    $region9: #{_lambda_.1} parent=5 // pred_check
      _
    $region10: #{_lambda_.1} parent=5 // pred_check_branch
      %314 = sbr.rel (%p311) target = $region12
    $region11: #{_lambda_.1} parent=5 // pred_region
      %s315 = ssub.s32 %s16, 1
      // Predicated region
      $region13: #{_lambda_.1} parent=11 // pred_check
        %p316 = pneg %p49
      $region14: #{_lambda_.1} parent=11 // pred_check_branch
        %318 = sbr.rel (%p316) target = $region16
      $region15: #{_lambda_.1} parent=11 // pred_region
        _
      $region16: #{_lambda_.1} parent=11 // pred_fallthru
        _
      // Predicated region
      $region17: #{_lambda_.1} parent=11 // pred_check
        %p319 = pneg %p210
      $region18: #{_lambda_.1} parent=11 // pred_check_branch
        %321 = sbr.rel (%p319) target = $region20
      $region19: #{_lambda_.1} parent=11 // pred_region
        _
      $region20: #{_lambda_.1} parent=11 // pred_fallthru
        _
      // Predicated region
      $region21: #{_lambda_.1} parent=11 // pred_check
        %p322 = pneg %p231
      $region22: #{_lambda_.1} parent=11 // pred_check_branch
        %324 = sbr.rel (%p322) target = $region24
      $region23: #{_lambda_.1} parent=11 // pred_region
        _
      $region24: #{_lambda_.1} parent=11 // pred_fallthru
        _
      // Predicated region
      $region25: #{_lambda_.1} parent=11 // pred_check
        %p325 = pneg %p252
      $region26: #{_lambda_.1} parent=11 // pred_check_branch
        %327 = sbr.rel (%p325) target = $region28
      $region27: #{_lambda_.1} parent=11 // pred_region
        _
      $region28: #{_lambda_.1} parent=11 // pred_fallthru
        _
      // Predicated region
      $region29: #{_lambda_.1} parent=11 // pred_check
        %p328 = pneg %p273
      $region30: #{_lambda_.1} parent=11 // pred_check_branch
        %330 = sbr.rel (%p328) target = $region32
      $region31: #{_lambda_.1} parent=11 // pred_region
        _
      $region32: #{_lambda_.1} parent=11 // pred_fallthru
        _
    $region12: #{_lambda_.1} parent=5 // pred_fallthru
      _
    %p331 = scmp.lt.s32.totalorder %s16, 2
    // Predicated region
    $region33: #{_lambda_.1} parent=5 // pred_check
      %p332 = pneg %p331
    $region34: #{_lambda_.1} parent=5 // pred_check_branch
      %334 = sbr.rel (%p332) target = $region36
    $region35: #{_lambda_.1} parent=5 // pred_region
      // Predicated region
      $region37: #{_lambda_.1} parent=35 // pred_check
        %p335 = pneg %p71
      $region38: #{_lambda_.1} parent=35 // pred_check_branch
        %337 = sbr.rel (%p335) target = $region40
      $region39: #{_lambda_.1} parent=35 // pred_region
        %s338 = smul.u32 2, %s24
        %p339 = scmp.lt.s32.totalorder %s23, 1
        %s340 = scalar_select %p339, %s23, 1
        %p341 = scmp.lt.s32.totalorder %s338, 1
        %s342 = scalar_select %p341, %s338, 1
        %s343 = smul.addr %s340, 36
        %s344 = sadd.s32 %s342, %s343
        %s345 = smul.addr %s344, 4
        %s346 = scalar_lea.vmem %s1, %s345
        %s347 = smul.u32 2, %s24
      $region40: #{_lambda_.1} parent=35 // pred_fallthru
        _
      // Predicated region
      $region41: #{_lambda_.1} parent=35 // pred_check
        %p348 = pneg %p99
      $region42: #{_lambda_.1} parent=35 // pred_check_branch
        %350 = sbr.rel (%p348) target = $region44
      $region43: #{_lambda_.1} parent=35 // pred_region
        %s351 = smul.u32 2, %s24
        %p352 = scmp.lt.s32.totalorder %s23, 1
        %s353 = scalar_select %p352, %s23, 1
        %p354 = scmp.lt.s32.totalorder %s351, 1
        %s355 = scalar_select %p354, %s351, 1
        %s356 = smul.addr %s353, 4
        %s357 = sadd.s32 %s355, %s356
        %s358 = smul.addr %s357, 8
        %s359 = scalar_lea.vmem %s2, %s358
        %s360 = smul.u32 2, %s24
      $region44: #{_lambda_.1} parent=35 // pred_fallthru
        _
      // Predicated region
      $region45: #{_lambda_.1} parent=35 // pred_check
        %p361 = pneg %p127
      $region46: #{_lambda_.1} parent=35 // pred_check_branch
        %363 = sbr.rel (%p361) target = $region48
      $region47: #{_lambda_.1} parent=35 // pred_region
        %s364 = smul.u32 2, %s24
        %p365 = scmp.lt.s32.totalorder %s23, 1
        %s366 = scalar_select %p365, %s23, 1
        %p367 = scmp.lt.s32.totalorder %s364, 1
        %s368 = scalar_select %p367, %s364, 1
        %s369 = smul.addr %s366, 4
        %s370 = sadd.s32 %s368, %s369
        %s371 = smul.addr %s370, 8
        %s372 = scalar_lea.vmem %s3, %s371
        %s373 = smul.u32 2, %s24
      $region48: #{_lambda_.1} parent=35 // pred_fallthru
        _
      // Predicated region
      $region49: #{_lambda_.1} parent=35 // pred_check
        %p374 = pneg %p155
      $region50: #{_lambda_.1} parent=35 // pred_check_branch
        %376 = sbr.rel (%p374) target = $region52
      $region51: #{_lambda_.1} parent=35 // pred_region
        %s377 = smul.u32 2, %s24
        %p378 = scmp.lt.s32.totalorder %s23, 1
        %s379 = scalar_select %p378, %s23, 1
        %p380 = scmp.lt.s32.totalorder %s377, 1
        %s381 = scalar_select %p380, %s377, 1
        %s382 = smul.addr %s379, 4
        %s383 = sadd.s32 %s381, %s382
        %s384 = smul.addr %s383, 8
        %s385 = scalar_lea.vmem %s4, %s384
        %s386 = smul.u32 2, %s24
      $region52: #{_lambda_.1} parent=35 // pred_fallthru
        _
      // Predicated region
      $region53: #{_lambda_.1} parent=35 // pred_check
        %p387 = pneg %p183
      $region54: #{_lambda_.1} parent=35 // pred_check_branch
        %389 = sbr.rel (%p387) target = $region56
      $region55: #{_lambda_.1} parent=35 // pred_region
        %s390 = smul.u32 2, %s24
        %p391 = scmp.lt.s32.totalorder %s23, 1
        %s392 = scalar_select %p391, %s23, 1
        %p393 = scmp.lt.s32.totalorder %s390, 1
        %s394 = scalar_select %p393, %s390, 1
        %s395 = smul.addr %s392, 4
        %s396 = sadd.s32 %s394, %s395
        %s397 = smul.addr %s396, 8
        %s398 = scalar_lea.vmem %s5, %s397
        %s399 = smul.u32 2, %s24
      $region56: #{_lambda_.1} parent=35 // pred_fallthru
        _
    $region36: #{_lambda_.1} parent=5 // pred_fallthru
      _
    %p400 = scmp.le.s32.totalorder 1, %s16
    %p401 = scmp.lt.s32.totalorder %s16, 3
    %p402 = pnand %p400, %p401
    %p403 = pneg %p402
    // Predicated region
    $region57: #{_lambda_.1} parent=5 // pred_check
      _
    $region58: #{_lambda_.1} parent=5 // pred_check_branch
      %405 = sbr.rel (%p402) target = $region60
    $region59: #{_lambda_.1} parent=5 // pred_region
      %s406 = ssub.s32 %s16, 1
      %p407 = pneg %p49
      %p408 = pneg %p46
      %s409 = smul.u32 2, %s26
      %p410 = scmp.lt.s32.totalorder %s25, 1
      %s411 = scalar_select %p410, %s25, 1
      %p412 = scmp.lt.s32.totalorder %s409, 1
      %s413 = scalar_select %p412, %s409, 1
      %s414 = smul.addr %s411, 36
      %s415 = sadd.s32 %s413, %s414
      %s416 = smul.addr %s415, 4
      %s417 = scalar_lea.vmem %s1, %s416
      %p418 = pneg %p77
      %p419 = pneg %p74
      %s420 = smul.u32 2, %s26
      %p421 = scmp.lt.s32.totalorder %s25, 1
      %s422 = scalar_select %p421, %s25, 1
      %p423 = scmp.lt.s32.totalorder %s420, 1
      %s424 = scalar_select %p423, %s420, 1
      %s425 = smul.addr %s422, 4
      %s426 = sadd.s32 %s424, %s425
      %s427 = smul.addr %s426, 8
      %s428 = scalar_lea.vmem %s2, %s427
      %p429 = pneg %p105
      %p430 = pneg %p102
      %s431 = smul.u32 2, %s26
      %p432 = scmp.lt.s32.totalorder %s25, 1
      %s433 = scalar_select %p432, %s25, 1
      %p434 = scmp.lt.s32.totalorder %s431, 1
      %s435 = scalar_select %p434, %s431, 1
      %s436 = smul.addr %s433, 4
      %s437 = sadd.s32 %s435, %s436
      %s438 = smul.addr %s437, 8
      %s439 = scalar_lea.vmem %s3, %s438
      %p440 = pneg %p133
      %p441 = pneg %p130
      %s442 = smul.u32 2, %s26
      %p443 = scmp.lt.s32.totalorder %s25, 1
      %s444 = scalar_select %p443, %s25, 1
      %p445 = scmp.lt.s32.totalorder %s442, 1
      %s446 = scalar_select %p445, %s442, 1
      %s447 = smul.addr %s444, 4
      %s448 = sadd.s32 %s446, %s447
      %s449 = smul.addr %s448, 8
      %s450 = scalar_lea.vmem %s4, %s449
      %p451 = pneg %p161
      %p452 = pneg %p158
      %s453 = smul.u32 2, %s26
      %p454 = scmp.lt.s32.totalorder %s25, 1
      %s455 = scalar_select %p454, %s25, 1
      %p456 = scmp.lt.s32.totalorder %s453, 1
      %s457 = scalar_select %p456, %s453, 1
      %s458 = smul.addr %s455, 4
      %s459 = sadd.s32 %s457, %s458
      %s460 = smul.addr %s459, 8
      %s461 = scalar_lea.vmem %s5, %s460
      %p462 = pneg %p189
      %p463 = pneg %p186
      %p464 = pneg %p210
      %p465 = pneg %p207
      %p466 = pneg %p231
      %p467 = pneg %p228
      %p468 = pneg %p252
      %p469 = pneg %p249
      %p470 = pneg %p273
      %p471 = pneg %p270
      %p472 = pneg %p301
      %p473 = pneg %p298
      %s474 = smul.u32 2, %s26
      %p475 = scmp.lt.s32.totalorder %s25, 1
      %s476 = scalar_select %p475, %s25, 1
      %p477 = scmp.lt.s32.totalorder %s474, 1
      %s478 = scalar_select %p477, %s474, 1
      %s479 = smul.addr %s476, 16
      %s480 = sadd.s32 %s478, %s479
      %s481 = smul.addr %s480, 8
      %s482 = scalar_lea.vmem %s10, %s481
      %s483 = smul.u32 2, %s26
      %p484 = scmp.lt.s32.totalorder %s25, 1
      %s485 = scalar_select %p484, %s25, 1
      %p486 = scmp.lt.s32.totalorder %s483, 1
      %s487 = scalar_select %p486, %s483, 1
      %s488 = smul.addr %s485, 36
      %s489 = sadd.s32 %s487, %s488
      %s490 = smul.addr %s489, 4
      %s491 = scalar_lea.vmem %s1, %s490
      %s492 = smul.u32 2, %s26
      %s493 = smul.u32 2, %s26
      %p494 = scmp.lt.s32.totalorder %s25, 1
      %s495 = scalar_select %p494, %s25, 1
      %p496 = scmp.lt.s32.totalorder %s493, 1
      %s497 = scalar_select %p496, %s493, 1
      %s498 = smul.addr %s495, 4
      %s499 = sadd.s32 %s497, %s498
      %s500 = smul.addr %s499, 8
      %s501 = scalar_lea.vmem %s2, %s500
      %s502 = smul.u32 2, %s26
      %s503 = smul.u32 2, %s26
      %p504 = scmp.lt.s32.totalorder %s25, 1
      %s505 = scalar_select %p504, %s25, 1
      %p506 = scmp.lt.s32.totalorder %s503, 1
      %s507 = scalar_select %p506, %s503, 1
      %s508 = smul.addr %s505, 4
      %s509 = sadd.s32 %s507, %s508
      %s510 = smul.addr %s509, 8
      %s511 = scalar_lea.vmem %s3, %s510
      %s512 = smul.u32 2, %s26
      %s513 = smul.u32 2, %s26
      %p514 = scmp.lt.s32.totalorder %s25, 1
      %s515 = scalar_select %p514, %s25, 1
      %p516 = scmp.lt.s32.totalorder %s513, 1
      %s517 = scalar_select %p516, %s513, 1
      %s518 = smul.addr %s515, 4
      %s519 = sadd.s32 %s517, %s518
      %s520 = smul.addr %s519, 8
      %s521 = scalar_lea.vmem %s4, %s520
      %s522 = smul.u32 2, %s26
      %s523 = smul.u32 2, %s26
      %p524 = scmp.lt.s32.totalorder %s25, 1
      %s525 = scalar_select %p524, %s25, 1
      %p526 = scmp.lt.s32.totalorder %s523, 1
      %s527 = scalar_select %p526, %s523, 1
      %s528 = smul.addr %s525, 4
      %s529 = sadd.s32 %s527, %s528
      %s530 = smul.addr %s529, 8
      %s531 = scalar_lea.vmem %s5, %s530
      %s532 = smul.u32 2, %s26
      %s533 = smul.u32 2, %s26
      %p534 = scmp.lt.s32.totalorder %s25, 1
      %s535 = scalar_select %p534, %s25, 1
      %p536 = scmp.lt.s32.totalorder %s533, 1
      %s537 = scalar_select %p536, %s533, 1
      %s538 = smul.addr %s535, 16
      %s539 = sadd.s32 %s537, %s538
      %s540 = smul.addr %s539, 8
      %s541 = scalar_lea.vmem %s10, %s540
      %s542 = smul.u32 2, %s26
      %v544 = vld [vmem:[%s0] sm:$0xff]
      %v545 = vld [vmem:[%s0 + $0x8] sm:$0xff]
      %v546 = vld [vmem:[%s0 + $0x10] sm:$0xff]
      %v547 = vld [vmem:[%s0 + $0x18] sm:$0xff]
      %v548 = vld [vmem:[%s0 + $0x20] sm:$0xff]
      %v549 = vld [vmem:[%s0 + $0x28] sm:$0xff]
      %v550 = vld [vmem:[%s491] sm:$0xff]
      %v551 = vld [vmem:[%s491 + $0x8] sm:$0xff]
      %v552 = vld [vmem:[%s491 + $0x10] sm:$0xff]
      %v553 = vld [vmem:[%s491 + $0x18] sm:$0xff]
      %v554 = vld [vmem:[%s491 + $0x20] sm:$0xff]
      %v555 = vld [vmem:[%s491 + $0x28] sm:$0xff]
      %v556 = vld [vmem:[%s491 + $0x30] sm:$0xff]
      %v557 = vld [vmem:[%s491 + $0x38] sm:$0xff]
      %v558 = vld [vmem:[%s491 + $0x40] sm:$0xff]
      %v559 = vld [vmem:[%s491 + $0x48] sm:$0xff]
      %v560 = vld [vmem:[%s491 + $0x50] sm:$0xff]
      %v561 = vld [vmem:[%s491 + $0x58] sm:$0xff]
      %v562 = vld [vmem:[%s491 + $0x60] sm:$0xff]
      %v563 = vld [vmem:[%s491 + $0x68] sm:$0xff]
      %v564 = vld [vmem:[%s491 + $0x70] sm:$0xff]
      %v565 = vld [vmem:[%s491 + $0x78] sm:$0xff]
      %v566 = vld [vmem:[%s491 + $0x80] sm:$0xff]
      %v567 = vld [vmem:[%s491 + $0x88] sm:$0xff]
      %v574 = vunpack.c.l.b16 %v544
      %v575 = vunpack.c.h.b16 %v544
      %v576 = vunpack.c.l.b16 %v545
      %v577 = vunpack.c.h.b16 %v545
      %v578 = vunpack.c.l.b16 %v546
      %v579 = vunpack.c.h.b16 %v546
      %v580 = vunpack.c.l.b16 %v547
      %v581 = vunpack.c.h.b16 %v547
      %v582 = vunpack.c.l.b16 %v548
      %v583 = vunpack.c.h.b16 %v548
      %v584 = vunpack.c.l.b16 %v549
      %v585 = vunpack.c.h.b16 %v549
      %v586 = vpack.c.b16 %v576, %v574
      %v587 = vpack.c.b16 %v577, %v575
      %v588 = vpack.c.b16 %v580, %v578
      %v589 = vpack.c.b16 %v581, %v579
      %v590 = vpack.c.b16 %v584, %v582
      %v591 = vpack.c.b16 %v585, %v583
      %v613 = vunpack.c.l.b16 %v550
      %v614 = vunpack.c.h.b16 %v550
      %v615 = vunpack.c.l.b16 %v551
      %v616 = vunpack.c.h.b16 %v551
      %v617 = vunpack.c.l.b16 %v552
      %v618 = vunpack.c.h.b16 %v552
      %v619 = vunpack.c.l.b16 %v553
      %v620 = vunpack.c.h.b16 %v553
      %v621 = vunpack.c.l.b16 %v554
      %v622 = vunpack.c.h.b16 %v554
      %v623 = vunpack.c.l.b16 %v555
      %v624 = vunpack.c.h.b16 %v555
      %v625 = vunpack.c.l.b16 %v556
      %v626 = vunpack.c.h.b16 %v556
      %v627 = vunpack.c.l.b16 %v557
      %v628 = vunpack.c.h.b16 %v557
      %v629 = vunpack.c.l.b16 %v558
      %v630 = vunpack.c.h.b16 %v558
      %v631 = vunpack.c.l.b16 %v559
      %v632 = vunpack.c.h.b16 %v559
      %v633 = vunpack.c.l.b16 %v560
      %v634 = vunpack.c.h.b16 %v560
      %v635 = vunpack.c.l.b16 %v561
      %v636 = vunpack.c.h.b16 %v561
      %v637 = vunpack.c.l.b16 %v562
      %v638 = vunpack.c.h.b16 %v562
      %v639 = vunpack.c.l.b16 %v563
      %v640 = vunpack.c.h.b16 %v563
      %v641 = vunpack.c.l.b16 %v564
      %v642 = vunpack.c.h.b16 %v564
      %v643 = vunpack.c.l.b16 %v565
      %v644 = vunpack.c.h.b16 %v565
      %v645 = vunpack.c.l.b16 %v566
      %v646 = vunpack.c.h.b16 %v566
      %v647 = vunpack.c.l.b16 %v567
      %v648 = vunpack.c.h.b16 %v567
      %v649 = vpack.c.b16 %v615, %v613
      %v650 = vpack.c.b16 %v616, %v614
      %v651 = vpack.c.b16 %v619, %v617
      %v652 = vpack.c.b16 %v620, %v618
      %v653 = vpack.c.b16 %v623, %v621
      %v654 = vpack.c.b16 %v624, %v622
      %v655 = vpack.c.b16 %v627, %v625
      %v656 = vpack.c.b16 %v628, %v626
      %v657 = vpack.c.b16 %v631, %v629
      %v658 = vpack.c.b16 %v632, %v630
      %v659 = vpack.c.b16 %v635, %v633
      %v660 = vpack.c.b16 %v636, %v634
      %v661 = vpack.c.b16 %v639, %v637
      %v662 = vpack.c.b16 %v640, %v638
      %v663 = vpack.c.b16 %v643, %v641
      %v664 = vpack.c.b16 %v644, %v642
      %v665 = vpack.c.b16 %v647, %v645
      %v666 = vpack.c.b16 %v648, %v646
      %vm685 = vcmask 130048
      %v687 = vsel %vm685, %v587, 0
      %v690 = vsel %vm685, %v589, 0
      %v693 = vsel %vm685, %v591, 0
      %695 = vmatpush.bf16.msra.mxu0 %v663
      %696 = vmatpush.bf16.msra.mxu0 %v661
      %697 = vmatpush.bf16.msra.mxu0 %v659
      %698 = vmatpush.bf16.msra.mxu0 %v657
      %699 = vmatpush.bf16.msra.mxu0 %v655
      %700 = vmatpush.bf16.msra.mxu0 %v653
      %701 = vmatpush.bf16.msra.mxu0 %v651
      %702 = vmatpush.bf16.msra.mxu0 %v649
      %703 = vmatmul.bf16.gmra.mxu0 %v586
      %v704 = vpop.f32.mrf.mxu0
      %v705 = vadd.f32 0.0, %v704
      %v706 = vpop.f32.mrf.mxu0
      %v707 = vadd.f32 0.0, %v706
      %708 = vmatmul.bf16.gmra.mxu0 %v588
      %v709 = vpop.f32.mrf.mxu0
      %v710 = vadd.f32 0.0, %v709
      %v711 = vpop.f32.mrf.mxu0
      %v712 = vadd.f32 0.0, %v711
      %713 = vmatmul.bf16.gmra.mxu0 %v590
      %v714 = vpop.f32.mrf.mxu0
      %v715 = vadd.f32 0.0, %v714
      %v716 = vpop.f32.mrf.mxu0
      %v717 = vadd.f32 0.0, %v716
      %718 = vdwg.mxu0
      %719 = vmatpush.bf16.msra.mxu0 0
      %720 = vmatpush.bf16.msra.mxu0 0
      %721 = vmatpush.bf16.msra.mxu0 0
      %722 = vmatpush.bf16.msra.mxu0 0
      %723 = vmatpush.bf16.msra.mxu0 0
      %724 = vmatpush.bf16.msra.mxu0 0
      %725 = vmatpush.bf16.msra.mxu0 0
      %726 = vmatpush.bf16.msra.mxu0 %v665
      %727 = vmatmul.bf16.gmra.mxu0 %v687
      %v728 = vpop.f32.mrf.mxu0
      %v729 = vadd.f32 %v705, %v728
      %v730 = vpop.f32.mrf.mxu0
      %v731 = vadd.f32 %v707, %v730
      %732 = vmatmul.bf16.gmra.mxu0 %v690
      %v733 = vpop.f32.mrf.mxu0
      %v734 = vadd.f32 %v710, %v733
      %v735 = vpop.f32.mrf.mxu0
      %v736 = vadd.f32 %v712, %v735
      %737 = vmatmul.bf16.gmra.mxu0 %v693
      %v738 = vpop.f32.mrf.mxu0
      %v739 = vadd.f32 %v715, %v738
      %v740 = vpop.f32.mrf.mxu0
      %v741 = vadd.f32 %v717, %v740
      %742 = vdwg.mxu0
      %743 = vmatpush.bf16.msra.mxu0 %v664
      %744 = vmatpush.bf16.msra.mxu0 %v662
      %745 = vmatpush.bf16.msra.mxu0 %v660
      %746 = vmatpush.bf16.msra.mxu0 %v658
      %747 = vmatpush.bf16.msra.mxu0 %v656
      %748 = vmatpush.bf16.msra.mxu0 %v654
      %749 = vmatpush.bf16.msra.mxu0 %v652
      %750 = vmatpush.bf16.msra.mxu0 %v650
      %751 = vmatmul.bf16.gmra.mxu0 %v586
      %v752 = vpop.f32.mrf.mxu0
      %v753 = vadd.f32 0.0, %v752
      %v754 = vpop.f32.mrf.mxu0
      %v755 = vadd.f32 0.0, %v754
      %756 = vmatmul.bf16.gmra.mxu0 %v588
      %v757 = vpop.f32.mrf.mxu0
      %v758 = vadd.f32 0.0, %v757
      %v759 = vpop.f32.mrf.mxu0
      %v760 = vadd.f32 0.0, %v759
      %761 = vmatmul.bf16.gmra.mxu0 %v590
      %v762 = vpop.f32.mrf.mxu0
      %v763 = vadd.f32 0.0, %v762
      %v764 = vpop.f32.mrf.mxu0
      %v765 = vadd.f32 0.0, %v764
      %766 = vdwg.mxu0
      %767 = vmatpush.bf16.msra.mxu0 0
      %768 = vmatpush.bf16.msra.mxu0 0
      %769 = vmatpush.bf16.msra.mxu0 0
      %770 = vmatpush.bf16.msra.mxu0 0
      %771 = vmatpush.bf16.msra.mxu0 0
      %772 = vmatpush.bf16.msra.mxu0 0
      %773 = vmatpush.bf16.msra.mxu0 0
      %774 = vmatpush.bf16.msra.mxu0 %v666
      %775 = vmatmul.bf16.gmra.mxu0 %v687
      %v776 = vpop.f32.mrf.mxu0
      %v777 = vadd.f32 %v753, %v776
      %v778 = vpop.f32.mrf.mxu0
      %v779 = vadd.f32 %v755, %v778
      %780 = vmatmul.bf16.gmra.mxu0 %v690
      %v781 = vpop.f32.mrf.mxu0
      %v782 = vadd.f32 %v758, %v781
      %v783 = vpop.f32.mrf.mxu0
      %v784 = vadd.f32 %v760, %v783
      %785 = vmatmul.bf16.gmra.mxu0 %v693
      %v786 = vpop.f32.mrf.mxu0
      %v787 = vadd.f32 %v763, %v786
      %v788 = vpop.f32.mrf.mxu0
      %v789 = vadd.f32 %v765, %v788
      %790 = vdwg.mxu0
      %v791 = vld [vmem:[%s6] sm:$0xff]
      %v792 = vld [vmem:[%s6 + $0x8] sm:$0xff]
      %v793 = vld [vmem:[%s6 + $0x10] sm:$0xff]
      %v794 = vld [vmem:[%s6 + $0x18] sm:$0xff]
      %v795 = vld [vmem:[%s6 + $0x20] sm:$0xff]
      %v796 = vld [vmem:[%s6 + $0x28] sm:$0xff]
      %798 = vset.pattern.permute.xlu0 0
      %799 = vperm.xlu0 %798, %v791
      %v800 = vpop.permute.xlu0 %799
      %803 = vset.pattern.permute.xlu0 0
      %804 = vperm.xlu0 %803, %v792
      %v805 = vpop.permute.xlu0 %804
      %808 = vset.pattern.permute.xlu0 0
      %809 = vperm.xlu0 %808, %v793
      %v810 = vpop.permute.xlu0 %809
      %813 = vset.pattern.permute.xlu0 0
      %814 = vperm.xlu0 %813, %v794
      %v815 = vpop.permute.xlu0 %814
      %818 = vset.pattern.permute.xlu0 0
      %819 = vperm.xlu0 %818, %v795
      %v820 = vpop.permute.xlu0 %819
      %823 = vset.pattern.permute.xlu0 0
      %824 = vperm.xlu0 %823, %v796
      %v825 = vpop.permute.xlu0 %824
      %v827 = vmul.f32 %v729, %v800
      %v828 = vmul.f32 %v777, %v800
      %v829 = vmul.f32 %v731, %v805
      %v830 = vmul.f32 %v779, %v805
      %v831 = vmul.f32 %v734, %v810
      %v832 = vmul.f32 %v782, %v810
      %v833 = vmul.f32 %v736, %v815
      %v834 = vmul.f32 %v784, %v815
      %v835 = vmul.f32 %v739, %v820
      %v836 = vmul.f32 %v787, %v820
      %v837 = vmul.f32 %v741, %v825
      %v838 = vmul.f32 %v789, %v825
      %v839 = vld [vmem:[%s7] sm:$0xff]
      %v840 = vld [vmem:[%s7 + $0x8] sm:$0xff]
      %v841 = vld [vmem:[%s7 + $0x10] sm:$0xff]
      %v842 = vld [vmem:[%s7 + $0x18] sm:$0xff]
      %v843 = vld [vmem:[%s7 + $0x20] sm:$0xff]
      %v844 = vld [vmem:[%s7 + $0x28] sm:$0xff]
      %846 = vset.pattern.permute.xlu0 0
      %847 = vperm.xlu0 %846, %v839
      %v848 = vpop.permute.xlu0 %847
      %851 = vset.pattern.permute.xlu0 0
      %852 = vperm.xlu0 %851, %v840
      %v853 = vpop.permute.xlu0 %852
      %856 = vset.pattern.permute.xlu0 0
      %857 = vperm.xlu0 %856, %v841
      %v858 = vpop.permute.xlu0 %857
      %861 = vset.pattern.permute.xlu0 0
      %862 = vperm.xlu0 %861, %v842
      %v863 = vpop.permute.xlu0 %862
      %866 = vset.pattern.permute.xlu0 0
      %867 = vperm.xlu0 %866, %v843
      %v868 = vpop.permute.xlu0 %867
      %871 = vset.pattern.permute.xlu0 0
      %872 = vperm.xlu0 %871, %v844
      %v873 = vpop.permute.xlu0 %872
      %v875 = vadd.f32 %v827, %v848
      %v876 = vadd.f32 %v828, %v848
      %v877 = vadd.f32 %v829, %v853
      %v878 = vadd.f32 %v830, %v853
      %v879 = vadd.f32 %v831, %v858
      %v880 = vadd.f32 %v832, %v858
      %v881 = vadd.f32 %v833, %v863
      %v882 = vadd.f32 %v834, %v863
      %v883 = vadd.f32 %v835, %v868
      %v884 = vadd.f32 %v836, %v868
      %v885 = vadd.f32 %v837, %v873
      %v886 = vadd.f32 %v838, %v873
      %v887 = vmax.f32 %v875, 0.0
      %v888 = vmax.f32 %v876, 0.0
      %v889 = vmax.f32 %v877, 0.0
      %v890 = vmax.f32 %v878, 0.0
      %v891 = vmax.f32 %v879, 0.0
      %v892 = vmax.f32 %v880, 0.0
      %v893 = vmax.f32 %v881, 0.0
      %v894 = vmax.f32 %v882, 0.0
      %v895 = vmax.f32 %v883, 0.0
      %v896 = vmax.f32 %v884, 0.0
      %v897 = vmax.f32 %v885, 0.0
      %v898 = vmax.f32 %v886, 0.0
      %v899 = vld [vmem:[%s501] sm:$0xff]
      %v900 = vld [vmem:[%s501 + $0x8] sm:$0xff]
      %v901 = vld [vmem:[%s501 + $0x10] sm:$0xff]
      %v902 = vld [vmem:[%s501 + $0x18] sm:$0xff]
      %v903 = vld [vmem:[%s511] sm:$0xff]
      %v904 = vld [vmem:[%s511 + $0x8] sm:$0xff]
      %v905 = vld [vmem:[%s511 + $0x10] sm:$0xff]
      %v906 = vld [vmem:[%s511 + $0x18] sm:$0xff]
      %v907 = vmax.f32 %v899, %v903
      %v908 = vmax.f32 %v900, %v904
      %v909 = vmax.f32 %v901, %v905
      %v910 = vmax.f32 %v902, %v906
      %v911 = vld [vmem:[%s521] sm:$0xff]
      %v912 = vld [vmem:[%s521 + $0x8] sm:$0xff]
      %v913 = vld [vmem:[%s521 + $0x10] sm:$0xff]
      %v914 = vld [vmem:[%s521 + $0x18] sm:$0xff]
      %v915 = vld [vmem:[%s531] sm:$0xff]
      %v916 = vld [vmem:[%s531 + $0x8] sm:$0xff]
      %v917 = vld [vmem:[%s531 + $0x10] sm:$0xff]
      %v918 = vld [vmem:[%s531 + $0x18] sm:$0xff]
      %v919 = vmax.f32 %v911, %v915
      %v920 = vmax.f32 %v912, %v916
      %v921 = vmax.f32 %v913, %v917
      %v922 = vmax.f32 %v914, %v918
      %v923 = vmax.f32 %v907, %v919
      %v924 = vmax.f32 %v908, %v920
      %v925 = vmax.f32 %v909, %v921
      %v926 = vmax.f32 %v910, %v922
      %v927 = vld [vmem:[%s8] sm:$0xff]
      %v928 = vld [vmem:[%s8 + $0x8] sm:$0xff]
      %930 = vset.pattern.permute.xlu0 0
      %931 = vperm.xlu0 %930, %v927
      %v932 = vpop.permute.xlu0 %931
      %935 = vset.pattern.permute.xlu0 0
      %936 = vperm.xlu0 %935, %v928
      %v937 = vpop.permute.xlu0 %936
      %v939 = vmul.f32 %v923, %v932
      %v940 = vmul.f32 %v924, %v932
      %v941 = vmul.f32 %v925, %v937
      %v942 = vmul.f32 %v926, %v937
      %v943 = vld [vmem:[%s9] sm:$0xff]
      %v944 = vld [vmem:[%s9 + $0x8] sm:$0xff]
      %946 = vset.pattern.permute.xlu0 0
      %947 = vperm.xlu0 %946, %v943
      %v948 = vpop.permute.xlu0 %947
      %951 = vset.pattern.permute.xlu0 0
      %952 = vperm.xlu0 %951, %v944
      %v953 = vpop.permute.xlu0 %952
      %v955 = vadd.f32 %v939, %v948
      %v956 = vadd.f32 %v940, %v948
      %v957 = vadd.f32 %v941, %v953
      %v958 = vadd.f32 %v942, %v953
      %v959 = vmax.f32 %v955, 0.0
      %v960 = vmax.f32 %v956, 0.0
      %v961 = vmax.f32 %v957, 0.0
      %v962 = vmax.f32 %v958, 0.0
      %963 = vst [vmem:[%s541] sm:$0xff] %v887
      %964 = vst [vmem:[%s541 + $0x8] sm:$0xff] %v888
      %965 = vst [vmem:[%s541 + $0x10] sm:$0xff] %v889
      %966 = vst [vmem:[%s541 + $0x18] sm:$0xff] %v890
      %967 = vst [vmem:[%s541 + $0x20] sm:$0xff] %v891
      %968 = vst [vmem:[%s541 + $0x28] sm:$0xff] %v892
      %969 = vst [vmem:[%s541 + $0x30] sm:$0xff] %v893
      %970 = vst [vmem:[%s541 + $0x38] sm:$0xff] %v894
      %971 = vst [vmem:[%s541 + $0x40] sm:$0xff] %v895
      %972 = vst [vmem:[%s541 + $0x48] sm:$0xff] %v896
      %973 = vst [vmem:[%s541 + $0x50] sm:$0xff] %v897
      %974 = vst [vmem:[%s541 + $0x58] sm:$0xff] %v898
      %975 = vst [vmem:[%s541 + $0x60] sm:$0xff] %v959
      %976 = vst [vmem:[%s541 + $0x68] sm:$0xff] %v960
      %977 = vst [vmem:[%s541 + $0x70] sm:$0xff] %v961
      %978 = vst [vmem:[%s541 + $0x78] sm:$0xff] %v962
      %s979 = smul.u32 2, %s26
      %p980 = scmp.lt.s32.totalorder %s25, 1
      %s981 = scalar_select %p980, %s25, 1
      %p982 = scmp.lt.s32.totalorder %s979, 1
      %s983 = scalar_select %p982, %s979, 1
      %s984 = smul.addr %s981, 16
      %s985 = sadd.s32 %s983, %s984
      %s986 = smul.addr %s985, 8
      %s987 = scalar_lea.vmem %s10, %s986
      // Predicated region
      $region61: #{_lambda_.1} parent=59 // pred_check
        %p988 = pneg %p298
      $region62: #{_lambda_.1} parent=59 // pred_check_branch
        %990 = sbr.rel (%p988) target = $region64
      $region63: #{_lambda_.1} parent=59 // pred_region
        %s991 = smul.u32 2, %s26
      $region64: #{_lambda_.1} parent=59 // pred_fallthru
        _
    $region60: #{_lambda_.1} parent=5 // pred_fallthru
      _
    %p992 = scmp.le.s32.totalorder 2, %s16
    // Predicated region
    $region65: #{_lambda_.1} parent=5 // pred_check
      %p993 = pneg %p992
    $region66: #{_lambda_.1} parent=5 // pred_check_branch
      %995 = sbr.rel (%p993) target = $region68
    $region67: #{_lambda_.1} parent=5 // pred_region
      %s996 = ssub.s32 %s16, 2
      // Predicated region
      $region69: #{_lambda_.1} parent=67 // pred_check
        %p997 = pneg %p304
      $region70: #{_lambda_.1} parent=67 // pred_check_branch
        %999 = sbr.rel (%p997) target = $region72
      $region71: #{_lambda_.1} parent=67 // pred_region
        %s1000 = smul.u32 2, %s28
        %p1001 = scmp.lt.s32.totalorder %s27, 1
        %s1002 = scalar_select %p1001, %s27, 1
        %p1003 = scmp.lt.s32.totalorder %s1000, 1
        %s1004 = scalar_select %p1003, %s1000, 1
        %s1005 = smul.addr %s1002, 16
        %s1006 = sadd.s32 %s1004, %s1005
        %s1007 = smul.addr %s1006, 8
        %s1008 = scalar_lea.vmem %s10, %s1007
      $region72: #{_lambda_.1} parent=67 // pred_fallthru
        _
    $region68: #{_lambda_.1} parent=5 // pred_fallthru
      _
  $region6: #{_lambda_.1} parent=0 // loop_footer
    %s20 = sadd.s32 1, %s16
  $region7: #{_lambda_.1} parent=0 // loop_footer_branch
    %15 = sbr.rel target = $region3
  $region8: #{_lambda_.1} parent=0 // loop_exit
    _

</llo_original>
